<compile_context>
chip_gen: v6e
topology: v6e:2x2x1
jax: 0.10.0
libtpu: 0.0.40
codegen_flags: <defaults>
</compile_context>

<pallas_src>
import functools

import jax
import jax.numpy as jnp
from jax.experimental import pallas as pl
from jax.experimental.pallas import tpu as pltpu


def _round_up(x, m):
    return (x + m - 1) // m * m


def _round_down(x, m):
    return (x // m) * m


def mult_attn_kernel(s_ref, h_ref, w_ref, out_ref, scores_ref, *, s_chunk):
    """One batch block of MultiplicativeAttention.

    s_ref     : (bb, Dd)     decoder hidden block (input dtype)
    h_ref     : (bb, S, De)  encoder outputs block (input dtype, never upcast wholesale)
    w_ref     : (Dd, De)     projection weight, VMEM-resident across grid steps
    out_ref   : (bb, S)      attention weights (f32)
    scores_ref: (bb, S)      f32 scratch for raw scores
    """
    seq_len = scores_ref.shape[-1]

    # MXU: proj = s @ Wᵀ, accumulated in f32 regardless of input dtype.
    proj = jnp.dot(s_ref[...], w_ref[...],
                   preferred_element_type=jnp.float32)          # (bb, De)
    proj_b = proj[:, None, :]                                   # (bb, 1, De), hoisted

    # scores[b, t] = <h[b, t, :], proj[b, :]>, chunked along S so the f32
    # product temp stays small and bf16 h is upcast one chunk at a time.
    for lo in range(0, seq_len, s_chunk):
        hi = min(seq_len, lo + s_chunk)
        h_c = h_ref[:, lo:hi, :].astype(jnp.float32)            # (bb, hi-lo, De)
        scores_ref[:, lo:hi] = jnp.sum(h_c * proj_b, axis=-1)   # (bb, hi-lo)

    # Numerically stable softmax over the sequence axis; the divide becomes an
    # approximate EUP reciprocal + VPU multiply (frees the VALU slot).
    scores = scores_ref[...]
    m = jnp.max(scores, axis=-1, keepdims=True)
    p = jnp.exp(scores - m)
    l = jnp.sum(p, axis=-1, keepdims=True)
    attn = p * pl.reciprocal(l, approx=True)
    out_ref[...] = attn.astype(out_ref.dtype)


def multiplicative_attention(s, h, weight, *,
                             h_tile_budget_bytes=8 * 1024 * 1024,
                             max_s_chunks=16):
    """Pallas forward matching the PyTorch MultiplicativeAttention module."""
    B, S, De = h.shape
    Dd = s.shape[-1]
    assert weight.shape == (De, Dd), "weight must be nn.Linear(dec_hid, enc_hid).weight"

    compute_dtype = h.dtype                 # pass bf16 h/s/weight at realistic sizes
    itemsize = jnp.dtype(compute_dtype).itemsize

    # ---- batch block sizing -------------------------------------------------
    # Largest multiple-of-8 batch tile whose h block fits the per-buffer VMEM
    # budget (the pipeline double-buffers it); clamp to [8, 256].
    row_bytes = S * De * itemsize
    bb = max(8, min(256, _round_down(h_tile_budget_bytes // max(row_bytes, 1), 8)))
    bb = min(bb, _round_up(B, 8))
    if B > 8:  # keep >= 2 grid steps so both v7x TensorCores get work
        bb = min(bb, max(8, _round_up(pl.cdiv(B, 2), 8)))
    n_blocks = pl.cdiv(B, bb)
    Bp = n_blocks * bb
    # TODO(synk): for S*De so large that even a block_b=8 h tile exceeds the VMEM
    # budget, add an "arbitrary" grid axis over S with an online softmax.

    # ---- S chunk size for the in-kernel contraction -------------------------
    n_chunks = max(1, min(max_s_chunks, pl.cdiv(S, 8)))
    s_chunk = _round_up(pl.cdiv(S, n_chunks), 8)

    # ---- host-side prep: only tiny arrays are touched; h is passed as-is ----
    s_p = jnp.pad(s.astype(compute_dtype), ((0, Bp - B), (0, 0)))
    w_t = weight.T.astype(compute_dtype)                       # (Dd, De), resident

    # ---- explicit VMEM budget (sized to be safe on v7x's 64 MiB) ------------
    h_tile = bb * S * De * itemsize
    vmem_need = (2 * h_tile                       # h, double-buffered
                 + 2 * bb * Dd * itemsize         # s
                 + 2 * Dd * De * itemsize         # weight
                 + 2 * bb * S * 4                 # out
                 + bb * S * 4                     # scores scratch
                 + 4 * bb * s_chunk * De * 4      # in-kernel chunk temporaries
                 + (4 << 20))                     # slack
    vmem_limit = int(min(56 << 20, max(32 << 20, vmem_need)))

    out = pl.pallas_call(
        functools.partial(mult_attn_kernel, s_chunk=s_chunk),
        out_shape=jax.ShapeDtypeStruct((Bp, S), jnp.float32),
        grid_spec=pltpu.PrefetchScalarGridSpec(
            num_scalar_prefetch=0,
            grid=(n_blocks,),
            in_specs=[
                pl.BlockSpec((bb, Dd), lambda i: (i, 0)),
                pl.BlockSpec((bb, S, De), lambda i: (i, 0, 0)),  # full S/De, unpadded
                pl.BlockSpec((Dd, De), lambda i: (0, 0)),        # weight resident
            ],
            out_specs=pl.BlockSpec((bb, S), lambda i: (i, 0)),
            scratch_shapes=[pltpu.VMEM((bb, S), jnp.float32)],
        ),
        compiler_params=pltpu.CompilerParams(
            dimension_semantics=("parallel",),
            vmem_limit_bytes=vmem_limit),
    )(s_p, h, w_t)

    return out[:B]


def multiplicative_attention_reference(s, h, weight):
    """Pure-JAX mirror of the PyTorch forward (f32)."""
    proj = s @ weight.T                          # (B, De)  == self.W(s)
    scores = jnp.einsum('bse,be->bs', h, proj)   # bmm(h, proj.unsqueeze(2)).squeeze(2)
    return jax.nn.softmax(scores, axis=1)


if __name__ == "__main__":
    # Small shapes: batch=2, src_len=8, enc_hid=32, dec_hid=32.
    B, S, De, Dd = 2, 8, 32, 32

    key = jax.random.PRNGKey(0)
    k1, k2, k3 = jax.random.split(key, 3)
    s = jax.random.normal(k1, (B, Dd), jnp.float32)
    h = jax.random.normal(k2, (B, S, De), jnp.float32)
    weight = 0.2 * jax.random.normal(k3, (De, Dd), jnp.float32)  # PyTorch (out, in) layout

    attn_ref = multiplicative_attention_reference(s, h, weight)

    # f32 path (exact inputs; slack only for the approximate EUP reciprocal).
    attn = jax.block_until_ready(multiplicative_attention(s, h, weight))
    assert attn.shape == (B, S)
    assert jnp.allclose(attn, attn_ref, atol=2e-2, rtol=2e-2)
    assert jnp.allclose(jnp.sum(attn, axis=-1), jnp.ones((B,)), atol=2e-2)

    # bf16 path (production dtype: halves the dominant HBM stream; the kernel
    # never upcasts the whole h block).  Loose tolerance for bf16 quantisation.
    attn_bf = jax.block_until_ready(
        multiplicative_attention(s.astype(jnp.bfloat16),
                                 h.astype(jnp.bfloat16),
                                 weight.astype(jnp.bfloat16)))
    assert attn_bf.shape == (B, S)
    assert jnp.allclose(attn_bf, attn_ref, atol=5e-2, rtol=5e-2)
    assert jnp.allclose(jnp.sum(attn_bf, axis=-1), jnp.ones((B,)), atol=2e-2)

    print("KERNEL_OK")
</pallas_src>

<mosaic_0001>
module attributes {stable_mosaic.version = 11 : i64} {
  func.func @mult_attn_kernel(%arg0: i32, %arg1: memref<8x32xf32, #tpu.memory_space<vmem>>, %arg2: memref<8x8x32xf32, #tpu.memory_space<vmem>>, %arg3: memref<32x32xf32, #tpu.memory_space<vmem>>, %arg4: memref<8x8xf32, #tpu.memory_space<vmem>>, %arg5: memref<8x8xf32, #tpu.memory_space<vmem>>) attributes {dimension_semantics = [#tpu.dimension_semantics<parallel>], iteration_bounds = array<i64: 1>, scalar_prefetch = 0 : i64, scratch_operands = 1 : i64, tpu.core_type = #tpu.core_type<tc>, window_params = [{transform_indices = @transform_0, window_bounds = array<i64: 8, 32>}, {transform_indices = @transform_1, window_bounds = array<i64: 8, 8, 32>}, {pipeline_mode = #tpu.pipeline_mode<synchronous>, transform_indices = @transform_2, window_bounds = array<i64: 32, 32>}, {transform_indices = @transform_3, window_bounds = array<i64: 8, 8>}]} {
    %c0 = arith.constant 0 : index
    %c0_0 = arith.constant 0 : index
    %0 = vector.load %arg1[%c0, %c0_0] : memref<8x32xf32, #tpu.memory_space<vmem>>, vector<8x32xf32>
    %c0_1 = arith.constant 0 : index
    %c0_2 = arith.constant 0 : index
    %1 = vector.load %arg3[%c0_1, %c0_2] : memref<32x32xf32, #tpu.memory_space<vmem>>, vector<32x32xf32>
    %cst = arith.constant dense<0.000000e+00> : vector<8x32xf32>
    %2 = tpu.matmul %0, %1, %cst {dimension_numbers = #tpu.dot_dimension_numbers<[1], [0], [0], [1], [0, 0, 1, 1], [], []>} : vector<8x32xf32>, vector<32x32xf32>, vector<8x32xf32> -> vector<8x32xf32>
    %3 = vector.shape_cast %2 : vector<8x32xf32> to vector<8x1x32xf32>
    %c0_3 = arith.constant 0 : index
    %c0_4 = arith.constant 0 : index
    %c0_5 = arith.constant 0 : index
    %4 = vector.load %arg2[%c0_3, %c0_4, %c0_5] : memref<8x8x32xf32, #tpu.memory_space<vmem>>, vector<8x8x32xf32>
    %5 = vector.broadcast %3 : vector<8x1x32xf32> to vector<8x8x32xf32>
    %6 = arith.mulf %4, %5 : vector<8x8x32xf32>
    %cst_6 = arith.constant dense<0.000000e+00> : vector<8x8xf32>
    %7 = vector.multi_reduction <add>, %6, %cst_6 [2] : vector<8x8x32xf32> to vector<8x8xf32>
    %c0_7 = arith.constant 0 : index
    %c0_8 = arith.constant 0 : index
    %8 = vector.load %arg5[%c0_7, %c0_8] : memref<8x8xf32, #tpu.memory_space<vmem>>, vector<8x8xf32>
    tpu.vector_store %arg5[%c0_7, %c0_8], %7 {strides = array<i32>} : memref<8x8xf32, #tpu.memory_space<vmem>>, vector<8x8xf32>,
    %c0_9 = arith.constant 0 : index
    %c0_10 = arith.constant 0 : index
    %9 = vector.load %arg5[%c0_9, %c0_10] : memref<8x8xf32, #tpu.memory_space<vmem>>, vector<8x8xf32>
    %cst_11 = arith.constant dense<0xFF800000> : vector<8xf32>
    %10 = vector.multi_reduction <maximumf>, %9, %cst_11 [1] : vector<8x8xf32> to vector<8xf32>
    %11 = vector.shape_cast %10 : vector<8xf32> to vector<8x1xf32>
    %12 = vector.broadcast %11 : vector<8x1xf32> to vector<8x8xf32>
    %13 = arith.subf %9, %12 : vector<8x8xf32>
    %14 = math.exp %13 : vector<8x8xf32>
    %cst_12 = arith.constant dense<0.000000e+00> : vector<8xf32>
    %15 = vector.multi_reduction <add>, %14, %cst_12 [1] : vector<8x8xf32> to vector<8xf32>
    %16 = vector.shape_cast %15 : vector<8xf32> to vector<8x1xf32>
    %17 = tpu.reciprocal %16 {approx = true} : vector<8x1xf32> -> vector<8x1xf32>
    %18 = vector.broadcast %17 : vector<8x1xf32> to vector<8x8xf32>
    %19 = arith.mulf %14, %18 : vector<8x8xf32>
    %c0_13 = arith.constant 0 : index
    %c0_14 = arith.constant 0 : index
    %20 = vector.load %arg4[%c0_13, %c0_14] : memref<8x8xf32, #tpu.memory_space<vmem>>, vector<8x8xf32>
    tpu.vector_store %arg4[%c0_13, %c0_14], %19 {strides = array<i32>} : memref<8x8xf32, #tpu.memory_space<vmem>>, vector<8x8xf32>,
    return
  }
  func.func @transform_0(%arg0: i32) -> (i32, i32) {
    %c0_i32 = arith.constant 0 : i32
    %c0_i32_0 = arith.constant 0 : i32
    return %arg0, %c0_i32 : i32, i32
  }
  func.func @transform_1(%arg0: i32) -> (i32, i32, i32) {
    %c0_i32 = arith.constant 0 : i32
    %c0_i32_0 = arith.constant 0 : i32
    %c0_i32_1 = arith.constant 0 : i32
    return %arg0, %c0_i32, %c0_i32_0 : i32, i32, i32
  }
  func.func @transform_2(%arg0: i32) -> (i32, i32) {
    %c0_i32 = arith.constant 0 : i32
    %c0_i32_0 = arith.constant 0 : i32
    %c0_i32_1 = arith.constant 0 : i32
    return %c0_i32, %c0_i32_0 : i32, i32
  }
  func.func @transform_3(%arg0: i32) -> (i32, i32) {
    %c0_i32 = arith.constant 0 : i32
    %c0_i32_0 = arith.constant 0 : i32
    return %arg0, %c0_i32 : i32, i32
  }
}

</mosaic_0001>

<llo_original>
// kernel: tpu_custom_call.1
$region0: #{tpu_custom_call.1}
  #allocation0 [shape = 'u32[]', space=smem, size = 0x4, offset = 0x4, fixed_abs, tag = 'smem constant byte address 0x4 - core index']
  #allocation1 [shape = 'u32[144,128]{1,0:T(1,128)}', space=vmem, size = 0x12000, scoped, tag = 'internal scratch']
  #allocation2 [shape = 'f32[8,8]{1,0:T(8,128)}', space=vmem, size = 0x1000, scoped, tag = 'scratch operand']
  %s0 = inlined_call_operand.hbm [shape: f32[8,32], index: 0, kind: input, shape index: {}]
  %s1 = inlined_call_operand.hbm [shape: f32[2,8,32], index: 1, kind: input, shape index: {}]
  %s2 = inlined_call_operand.hbm [shape: f32[32,32], index: 2, kind: input, shape index: {}]
  %s3 = inlined_call_operand.hbm [shape: f32[8,8], index: 3, kind: output, shape index: {}]
  %s4 = sld [smem:[#allocation0]]
  $region34: #{tpu_custom_call.1} parent=0
    _
  %s6 = ssub.s32 1, %s4
  %s7 = scalar_select 0, %s6, %s4
  $region1: #{tpu_custom_call.1} parent=0
    #allocation3 [shape = 'u8[4096]{0}', space=vmem, size = 0x1000, scoped, tag = 'input window, operand 0, single buffered']
    #allocation4 [shape = 's32[1]{0}', space=sflag, size = 0x4, scoped, tag = 'scoped memory for tpu_custom_call.1']
    #allocation5 [shape = 's32[1]{0}', space=sflag, size = 0x4, scoped, tag = 'scoped memory for tpu_custom_call.1']
    #allocation6 [shape = 'u8[32768]{0}', space=vmem, size = 0x8000, scoped, tag = 'input window, operand 1, single buffered']
    #allocation7 [shape = 's32[1]{0}', space=sflag, size = 0x4, scoped, tag = 'scoped memory for tpu_custom_call.1']
    #allocation8 [shape = 'u8[16384]{0}', space=vmem, size = 0x4000, scoped, tag = 'input window, operand 2, single buffered']
    #allocation9 [shape = 'u8[4096]{0}', space=vmem, size = 0x1000, scoped, tag = 'output window, operand 0, single buffered']
    %8 = vsyncpa [#allocation4], 0
    %9 = vsyncpa [#allocation7], 0
    %10 = vsyncpa [#allocation5], 0
    // Predicated region
    $region2: #{tpu_custom_call.1} parent=1 // pred_check
      _
    $region3: #{tpu_custom_call.1} parent=1 // pred_check_branch
      %12 = sbr.rel (0) target = $region5
    $region4: #{tpu_custom_call.1} parent=1 // pred_region
      %s14 = ssub.s32 128, 128
      %15 = vsyncadd [#allocation4], %s14
      %s17 = sshll.u32 [#allocation3], 4
      %s18 = int_to_ptr.vmem [resolvable:$true] %s17
      %20 = dma.hbm_to_vmem [thread:$0]  %s0, 128, %s18, [#allocation4]
    $region5: #{tpu_custom_call.1} parent=1 // pred_fallthru
      _
    // Predicated region
    $region6: #{tpu_custom_call.1} parent=1 // pred_check
      _
    $region7: #{tpu_custom_call.1} parent=1 // pred_check_branch
      %22 = sbr.rel (0) target = $region9
    $region8: #{tpu_custom_call.1} parent=1 // pred_region
      %s24 = ssub.s32 1024, 256
      %25 = vsyncadd [#allocation7], %s24
      %s26 = sshll.u32 [#allocation6], 4
      %s27 = int_to_ptr.vmem [resolvable:$true] %s26
      %32 = dma.hbm_to_vmem [thread:$0]  %s1, 256, %s27, [#allocation7], 128, 128, 8
    $region9: #{tpu_custom_call.1} parent=1 // pred_fallthru
      _
    // Predicated region
    $region10: #{tpu_custom_call.1} parent=1 // pred_check
      _
    $region11: #{tpu_custom_call.1} parent=1 // pred_check_branch
      %34 = sbr.rel (0) target = $region13
    $region12: #{tpu_custom_call.1} parent=1 // pred_region
      %s36 = ssub.s32 512, 512
      %37 = vsyncadd [#allocation7], %s36
      %s38 = sshll.u32 [#allocation8], 4
      %s39 = int_to_ptr.vmem [resolvable:$true] %s38
      %44 = dma.hbm_to_vmem [thread:$0]  %s2, 512, %s39, [#allocation7], 128, 128, 8
    $region13: #{tpu_custom_call.1} parent=1 // pred_fallthru
      _
    // Predicated region
    $region14: #{tpu_custom_call.1} parent=1 // pred_check
      _
    $region15: #{tpu_custom_call.1} parent=1 // pred_check_branch
      %46 = sbr.rel (0) target = $region17
    $region16: #{tpu_custom_call.1} parent=1 // pred_region
      %47 = dma.done [#allocation4], 128
    $region17: #{tpu_custom_call.1} parent=1 // pred_fallthru
      _
    // Predicated region
    $region18: #{tpu_custom_call.1} parent=1 // pred_check
      _
    $region19: #{tpu_custom_call.1} parent=1 // pred_check_branch
      %49 = sbr.rel (0) target = $region21
    $region20: #{tpu_custom_call.1} parent=1 // pred_region
      %50 = dma.done [#allocation7], 1024
    $region21: #{tpu_custom_call.1} parent=1 // pred_fallthru
      _
    // Predicated region
    $region22: #{tpu_custom_call.1} parent=1 // pred_check
      _
    $region23: #{tpu_custom_call.1} parent=1 // pred_check_branch
      %52 = sbr.rel (0) target = $region25
    $region24: #{tpu_custom_call.1} parent=1 // pred_region
      %53 = dma.done [#allocation7], 512
    $region25: #{tpu_custom_call.1} parent=1 // pred_fallthru
      _
    %v54 = vld [vmem:[#allocation3] sm:$0xff]
    %v55 = vld [vmem:[#allocation8] sm:$0xff]
    %v56 = vld [vmem:[#allocation8 + $0x8] sm:$0xff]
    %v57 = vld [vmem:[#allocation8 + $0x10] sm:$0xff]
    %v58 = vld [vmem:[#allocation8 + $0x18] sm:$0xff]
    %vm59 = vcmask 261120
    %v61 = vsel %vm59, %v54, 0
    %63 = vmatprep.subr.mxu0 0.0
    %64 = vmatpush1.msra.mxu0 0.0
    %65 = vmatprep.subr.mxu0 0.0
    %66 = vmatpush1.msra.mxu0 0.0
    %67 = vmatprep.subr.mxu0 0.0
    %68 = vmatpush1.msra.mxu0 0.0
    %69 = vmatprep.subr.mxu0 0.0
    %70 = vmatpush1.msra.mxu0 0.0
    %71 = vmatprep.subr.mxu0 0.0
    %72 = vmatpush1.msra.mxu0 0.0
    %73 = vmatprep.subr.mxu0 0.0
    %74 = vmatpush1.msra.mxu0 0.0
    %75 = vmatprep.subr.mxu0 0.0
    %76 = vmatpush1.msra.mxu0 0.0
    %77 = vmatprep.subr.mxu0 0.0
    %78 = vmatpush1.msra.mxu0 0.0
    %79 = vmatprep.subr.mxu0 0.0
    %80 = vmatpush1.msra.mxu0 0.0
    %81 = vmatprep.subr.mxu0 0.0
    %82 = vmatpush1.msra.mxu0 0.0
    %83 = vmatprep.subr.mxu0 0.0
    %84 = vmatpush1.msra.mxu0 0.0
    %85 = vmatprep.subr.mxu0 0.0
    %86 = vmatpush1.msra.mxu0 0.0
    %87 = vmatprep.subr.mxu0 0.0
    %88 = vmatpush1.msra.mxu0 %v58
    %89 = vmatprep.subr.mxu0 0.0
    %90 = vmatpush1.msra.mxu0 %v57
    %91 = vmatprep.subr.mxu0 0.0
    %92 = vmatpush1.msra.mxu0 %v56
    %93 = vmatprep.subr.mxu0 0.0
    %94 = vmatpush1.msra.mxu0 %v55
    %95 = vmatprep.subr.mxu0 0.0
    %96 = vmatpush2.msra.mxu0 0.0
    %97 = vmatprep.subr.mxu0 0.0
    %98 = vmatpush2.msra.mxu0 0.0
    %99 = vmatprep.subr.mxu0 0.0
    %100 = vmatpush2.msra.mxu0 0.0
    %101 = vmatprep.subr.mxu0 0.0
    %102 = vmatpush2.msra.mxu0 0.0
    %103 = vmatprep.subr.mxu0 0.0
    %104 = vmatpush2.msra.mxu0 0.0
    %105 = vmatprep.subr.mxu0 0.0
    %106 = vmatpush2.msra.mxu0 0.0
    %107 = vmatprep.subr.mxu0 0.0
    %108 = vmatpush2.msra.mxu0 0.0
    %109 = vmatprep.subr.mxu0 0.0
    %110 = vmatpush2.msra.mxu0 0.0
    %111 = vmatprep.subr.mxu0 0.0
    %112 = vmatpush2.msra.mxu0 0.0
    %113 = vmatprep.subr.mxu0 0.0
    %114 = vmatpush2.msra.mxu0 0.0
    %115 = vmatprep.subr.mxu0 0.0
    %116 = vmatpush2.msra.mxu0 0.0
    %117 = vmatprep.subr.mxu0 0.0
    %118 = vmatpush2.msra.mxu0 0.0
    %119 = vmatprep.subr.mxu0 0.0
    %120 = vmatpush2.msra.mxu0 0.0
    %121 = vmatprep.subr.mxu0 0.0
    %122 = vmatpush2.msra.mxu0 0.0
    %123 = vmatprep.subr.mxu0 0.0
    %124 = vmatpush2.msra.mxu0 0.0
    %125 = vmatprep.subr.mxu0 0.0
    %126 = vmatpush2.msra.mxu0 0.0
    %127 = vmatprep.mubr.f32.mxu0 0.0
    %128 = vmatmul.mubr.f32.gmra.mxu0 %v61
    %v129 = vpop.f32.mrf.mxu0
    %v130 = vadd.f32 0.0, %v129
    %v131 = vpop.f32.mrf.mxu0
    %132 = vdwg.mxu0
    %v134 = vcombine.high %v130, %v130
    %v136 = vunpack.c.l.s4 1966171168
    %v137 = vunpack.c.0.s8 %v136
    %v138 = vlaneseq
    %v139 = vshrl.u32 %v138, 7
    %v140 = vsub.s32 %v137, %v139
    %v141 = vrot.slane %v130, %v140
    %v143 = vunpack.c.l.s4 1966171168
    %v144 = vunpack.c.0.s8 %v143
    %v145 = vlaneseq
    %v146 = vshrl.u32 %v145, 7
    %v147 = vsub.s32 %v144, %v146
    %v148 = vrot.slane %v134, %v147
    %v149 = vcombine.high %v141, %v141
    %v150 = vcombine.high %v148, %v148
    %v152 = vunpack.c.l.s4 1966171168
    %v153 = vunpack.c.0.s8 %v152
    %v154 = vlaneseq
    %v155 = vshrl.u32 %v154, 7
    %v156 = vsub.s32 %v153, %v155
    %v157 = vrot.slane %v141, %v156
    %v159 = vunpack.c.l.s4 1966171168
    %v160 = vunpack.c.0.s8 %v159
    %v161 = vlaneseq
    %v162 = vshrl.u32 %v161, 7
    %v163 = vsub.s32 %v160, %v162
    %v164 = vrot.slane %v148, %v163
    %v166 = vunpack.c.l.s4 1966171168
    %v167 = vunpack.c.0.s8 %v166
    %v168 = vlaneseq
    %v169 = vshrl.u32 %v168, 7
    %v170 = vsub.s32 %v167, %v169
    %v171 = vrot.slane %v149, %v170
    %v173 = vunpack.c.l.s4 1966171168
    %v174 = vunpack.c.0.s8 %v173
    %v175 = vlaneseq
    %v176 = vshrl.u32 %v175, 7
    %v177 = vsub.s32 %v174, %v176
    %v178 = vrot.slane %v150, %v177
    %v179 = vcombine.high %v157, %v157
    %v180 = vcombine.high %v164, %v164
    %v181 = vcombine.high %v171, %v171
    %v182 = vcombine.high %v178, %v178
    %v183 = vld [vmem:[#allocation6] sm:$0xff]
    %v184 = vld [vmem:[#allocation6 + $0x8] sm:$0xff]
    %v185 = vld [vmem:[#allocation6 + $0x10] sm:$0xff]
    %v186 = vld [vmem:[#allocation6 + $0x18] sm:$0xff]
    %v187 = vld [vmem:[#allocation6 + $0x20] sm:$0xff]
    %v188 = vld [vmem:[#allocation6 + $0x28] sm:$0xff]
    %v189 = vld [vmem:[#allocation6 + $0x30] sm:$0xff]
    %v190 = vld [vmem:[#allocation6 + $0x38] sm:$0xff]
    %v191 = vlaneseq
    %v192 = vshrl.u32 %v191, 7
    %v193 = vsub.s32 0, %v192
    %v194 = vrot.slane %v157, %v193
    %v195 = vlaneseq
    %v196 = vshrl.u32 %v195, 7
    %v197 = vsub.s32 0, %v196
    %v198 = vrot.slane %v171, %v197
    %v199 = vlaneseq
    %v200 = vshrl.u32 %v199, 7
    %v201 = vsub.s32 0, %v200
    %v202 = vrot.slane %v179, %v201
    %v203 = vlaneseq
    %v204 = vshrl.u32 %v203, 7
    %v205 = vsub.s32 0, %v204
    %v206 = vrot.slane %v181, %v205
    %v207 = vlaneseq
    %v208 = vshrl.u32 %v207, 7
    %v209 = vsub.s32 0, %v208
    %v210 = vrot.slane %v164, %v209
    %v211 = vlaneseq
    %v212 = vshrl.u32 %v211, 7
    %v213 = vsub.s32 0, %v212
    %v214 = vrot.slane %v178, %v213
    %v215 = vlaneseq
    %v216 = vshrl.u32 %v215, 7
    %v217 = vsub.s32 0, %v216
    %v218 = vrot.slane %v180, %v217
    %v219 = vlaneseq
    %v220 = vshrl.u32 %v219, 7
    %v221 = vsub.s32 0, %v220
    %v222 = vrot.slane %v182, %v221
    %v231 = vmul.f32 %v183, %v194
    %v232 = vmul.f32 %v184, %v198
    %v233 = vmul.f32 %v185, %v202
    %v234 = vmul.f32 %v186, %v206
    %v235 = vmul.f32 %v187, %v210
    %v236 = vmul.f32 %v188, %v214
    %v237 = vmul.f32 %v189, %v218
    %v238 = vmul.f32 %v190, %v222
    %v239 = vsel %vm59, %v231, 0.0
    %240 = vadd.xlane.f32.xlu0 %v239
    %v241 = vpop.xlane.xlu0 %240
    %v242 = vsel %vm59, %v232, 0.0
    %243 = vadd.xlane.f32.xlu0 %v242
    %v244 = vpop.xlane.xlu0 %243
    %v245 = vsel %vm59, %v233, 0.0
    %246 = vadd.xlane.f32.xlu0 %v245
    %v247 = vpop.xlane.xlu0 %246
    %v248 = vsel %vm59, %v234, 0.0
    %249 = vadd.xlane.f32.xlu0 %v248
    %v250 = vpop.xlane.xlu0 %249
    %v251 = vsel %vm59, %v235, 0.0
    %252 = vadd.xlane.f32.xlu0 %v251
    %v253 = vpop.xlane.xlu0 %252
    %v254 = vsel %vm59, %v236, 0.0
    %255 = vadd.xlane.f32.xlu0 %v254
    %v256 = vpop.xlane.xlu0 %255
    %v257 = vsel %vm59, %v237, 0.0
    %258 = vadd.xlane.f32.xlu0 %v257
    %v259 = vpop.xlane.xlu0 %258
    %v260 = vsel %vm59, %v238, 0.0
    %261 = vadd.xlane.f32.xlu0 %v260
    %v262 = vpop.xlane.xlu0 %261
    %v271 = vlaneseq
    %v272 = vand.u32 %v271, 127
    %v273 = vlaneseq
    %v274 = vshrl.u32 %v273, 7
    %v275 = vsub.s32 %v272, %v274
    %v276 = vrot.slane %v241, %v275
    %v277 = vlaneseq
    %v278 = vshrl.u32 %v277, 7
    %v279 = vsub.s32 %v272, %v278
    %v280 = vrot.slane %v244, %v279
    %v281 = vlaneseq
    %v282 = vshrl.u32 %v281, 7
    %v283 = vsub.s32 %v272, %v282
    %v284 = vrot.slane %v247, %v283
    %v285 = vlaneseq
    %v286 = vshrl.u32 %v285, 7
    %v287 = vsub.s32 %v272, %v286
    %v288 = vrot.slane %v250, %v287
    %v289 = vlaneseq
    %v290 = vshrl.u32 %v289, 7
    %v291 = vsub.s32 %v272, %v290
    %v292 = vrot.slane %v253, %v291
    %v293 = vlaneseq
    %v294 = vshrl.u32 %v293, 7
    %v295 = vsub.s32 %v272, %v294
    %v296 = vrot.slane %v256, %v295
    %v297 = vlaneseq
    %v298 = vshrl.u32 %v297, 7
    %v299 = vsub.s32 %v272, %v298
    %v300 = vrot.slane %v259, %v299
    %v301 = vlaneseq
    %v302 = vshrl.u32 %v301, 7
    %v303 = vsub.s32 %v272, %v302
    %v304 = vrot.slane %v262, %v303
    %vm305 = vcmask 1041409
    %v306 = vsel %vm305, %v280, %v276
    %vm307 = vcmask 1042434
    %v308 = vsel %vm307, %v284, %v306
    %vm309 = vcmask 1043459
    %v310 = vsel %vm309, %v288, %v308
    %vm311 = vcmask 1044484
    %v312 = vsel %vm311, %v292, %v310
    %vm313 = vcmask 1045509
    %v314 = vsel %vm313, %v296, %v312
    %vm315 = vcmask 1046534
    %v316 = vsel %vm315, %v300, %v314
    %vm317 = vcmask 1047559
    %v318 = vsel %vm317, %v304, %v316
    %vm320 = vcmask 64512
    %321 = vst.msk [vmem:[#allocation2] sm:$0xff] %vm320, %v318
    %v322 = vld [vmem:[#allocation2] sm:$0xff]
    %v323 = vsel %vm320, %v322, -inf
    %324 = vmax.xlane.f32.xlu0 %v323
    %v325 = vpop.xlane.xlu0 %324
    %v326 = vsub.f32 %v322, %v325
    %v327 = vmul.f32 %v326, 1.442695
    %v328 = vpow.pop %v327
    %v329 = vsel %vm320, %v328, 0.0
    %330 = vadd.xlane.f32.xlu0 %v329
    %v331 = vpop.xlane.xlu0 %330
    %v332 = vrcp.pop %v331
    %v333 = vmul.f32 %v328, %v332
    %334 = vst.msk [vmem:[#allocation9] sm:$0xff] %vm320, %v333
    // Predicated region
    $region26: #{tpu_custom_call.1} parent=1 // pred_check
      _
    $region27: #{tpu_custom_call.1} parent=1 // pred_check_branch
      %336 = sbr.rel (0) target = $region29
    $region28: #{tpu_custom_call.1} parent=1 // pred_region
      %s338 = ssub.s32 128, 128
      %339 = vsyncadd [#allocation5], %s338
      %s341 = sshll.u32 [#allocation9], 4
      %s342 = int_to_ptr.vmem [resolvable:$true] %s341
      %344 = dma.vmem_to_hbm [thread:$0]  %s342, 128, %s3, [#allocation5]
    $region29: #{tpu_custom_call.1} parent=1 // pred_fallthru
      _
    // Predicated region
    $region30: #{tpu_custom_call.1} parent=1 // pred_check
      _
    $region31: #{tpu_custom_call.1} parent=1 // pred_check_branch
      %346 = sbr.rel (0) target = $region33
    $region32: #{tpu_custom_call.1} parent=1 // pred_region
      %347 = dma.done [#allocation5], 128
    $region33: #{tpu_custom_call.1} parent=1 // pred_fallthru
      _
    %348 = vsyncpa [#allocation4], 1
    %349 = vsyncpa [#allocation7], 1
    %350 = vsyncpa [#allocation5], 1

</llo_original>
